<compile_context>
chip_gen: v5e
topology: v5e:2x2
jax: 0.10.0
libtpu: 0.0.40
codegen_flags: <defaults>
</compile_context>

<pallas_src>
import functools
import math

import jax
import jax.numpy as jnp
from jax import lax
from jax.experimental import pallas as pl
from jax.experimental.pallas import tpu as pltpu


# --------------------------------------------------------------------------
# small helpers
# --------------------------------------------------------------------------
def _round_up(a: int, b: int) -> int:
    return (a + b - 1) // b * b


def _cdiv(a: int, b: int) -> int:
    return -(-a // b)


def _pad2(x, rows, cols):
    r, c = x.shape
    return jnp.pad(x, ((0, rows - r), (0, cols - c)))


def _token_tiles(m: int, tm_max: int):
    """Row tile (multiple of 8) and padded row count, with >= 2 grid steps
    whenever possible (v7x: 2 TensorCores) and minimal row padding."""
    m8 = _round_up(m, 8)
    n = max(2, _cdiv(m8, tm_max)) if m8 >= 16 else 1
    tm = _round_up(_cdiv(m8, n), 8)
    return tm, n * tm


def _prep_mask(mask, batch, q_pad, k_len, k_pad):
    """Pad mask to (B, 1|q_pad, k_pad) int32; padded key columns are 0 (masked)."""
    m = jnp.asarray(mask)
    if m.ndim == 2:
        m = m[None, :, :]
    rows = m.shape[1]
    m = jnp.broadcast_to(m, (batch, rows, k_len)).astype(jnp.int32)
    rows_pad = 1 if rows == 1 else q_pad
    return jnp.pad(m, ((0, 0), (0, rows_pad - rows), (0, k_pad - k_len)))


# --------------------------------------------------------------------------
# kernels
# --------------------------------------------------------------------------
def _layer_norm_rows(x, g, b, n_valid, eps):
    # x: (tm, Dp) f32, lanes >= n_valid are zero padding.
    lane = lax.broadcasted_iota(jnp.int32, x.shape, 1)
    valid = lane < n_valid
    mean = jnp.sum(x, axis=-1, keepdims=True) * (1.0 / n_valid)
    cen = jnp.where(valid, x - mean, 0.0)
    # unbiased std + eps outside sqrt, matching torch x.std(-1) based LayerNorm
    var = jnp.sum(cen * cen, axis=-1, keepdims=True) * (1.0 / (n_valid - 1))
    return g * cen / (jnp.sqrt(var) + eps) + b


def _ln_proj_kernel(x_ref, g_ref, b_ref, w_ref, bias_ref, o_ref, *,
                    n_valid, eps, compute_dtype):
    # Fused LayerNorm + (possibly concatenated QKV) projection. Output bf16.
    x = x_ref[...].astype(jnp.float32)
    normed = _layer_norm_rows(x, g_ref[...], b_ref[...], n_valid, eps)
    acc = jnp.dot(normed.astype(compute_dtype), w_ref[...],
                  preferred_element_type=jnp.float32)
    o_ref[...] = (acc + bias_ref[...]).astype(o_ref.dtype)


def _proj_kernel(x_ref, w_ref, bias_ref, o_ref, *, compute_dtype):
    # Plain (concatenated KV) projection, no norm. Output bf16.
    x = x_ref[...].astype(compute_dtype)
    acc = jnp.dot(x, w_ref[...], preferred_element_type=jnp.float32)
    o_ref[...] = (acc + bias_ref[...]).astype(o_ref.dtype)


def _attn_core(q, k, v, mask_ref, wo_ref, bo_ref, res_ref, o_ref, *,
               n_heads, dk, scale, compute_dtype):
    # q: (Tq, Dp), k/v: (S, Dp) bf16 with heads packed along lanes.
    # Output: residual + softmax(QK^T)V @ Wo + bo  (lane-dense Dp, f32).
    mask0 = mask_ref[...] == 0            # (1|Tq, S) bool, broadcast vs scores
    wo = wo_ref[...]                      # (Dp, Dp) f32
    tq, dp = q.shape[0], wo.shape[1]
    acc = jnp.zeros((tq, dp), jnp.float32)
    for h in range(n_heads):              # static head loop, lane slices
        lo, hi = h * dk, (h + 1) * dk
        s = lax.dot_general(q[:, lo:hi], k[:, lo:hi],
                            (((1,), (1,)), ((), ())),
                            preferred_element_type=jnp.float32) * scale
        s = jnp.where(mask0, -1e9, s)
        s = s - jnp.max(s, axis=-1, keepdims=True)
        p = jnp.exp(s)
        p = p / jnp.sum(p, axis=-1, keepdims=True)
        # TODO(synk): attention-internal dropout omitted (eval mode = identity).
        ctx = jnp.dot(p.astype(compute_dtype), v[:, lo:hi],
                      preferred_element_type=jnp.float32)
        acc = acc + jnp.dot(ctx.astype(compute_dtype),
                            wo[lo:hi, :].astype(compute_dtype),
                            preferred_element_type=jnp.float32)
    o_ref[...] = (res_ref[...].astype(jnp.float32) + acc + bo_ref[...]
                  ).astype(o_ref.dtype)


def _self_attn_kernel(qkv_ref, mask_ref, wo_ref, bo_ref, res_ref, o_ref, *,
                      n_heads, dk, dp, scale, compute_dtype):
    qkv = qkv_ref[...]                     # (Tq, 3*Dp) bf16
    _attn_core(qkv[:, :dp], qkv[:, dp:2 * dp], qkv[:, 2 * dp:3 * dp],
               mask_ref, wo_ref, bo_ref, res_ref, o_ref,
               n_heads=n_heads, dk=dk, scale=scale, compute_dtype=compute_dtype)


def _cross_attn_kernel(q_ref, kv_ref, mask_ref, wo_ref, bo_ref, res_ref, o_ref, *,
                       n_heads, dk, dp, scale, compute_dtype):
    kv = kv_ref[...]                       # (S, 2*Dp) bf16
    _attn_core(q_ref[...], kv[:, :dp], kv[:, dp:2 * dp],
               mask_ref, wo_ref, bo_ref, res_ref, o_ref,
               n_heads=n_heads, dk=dk, scale=scale, compute_dtype=compute_dtype)


def _ffn_kernel(x_ref, g_ref, bln_ref, w1_ref, b1_ref, w2_ref, b2_ref, o_ref,
                *, n_valid, eps, ff_chunk, compute_dtype):
    # Fused: out = x + relu(LN(x) @ W1 + b1) @ W2 + b2   (dropout = identity)
    x = x_ref[...].astype(jnp.float32)
    normed = _layer_norm_rows(x, g_ref[...], bln_ref[...], n_valid, eps
                              ).astype(compute_dtype)
    n_chunks = w1_ref.shape[1] // ff_chunk

    def body(c, acc):
        lo = pl.multiple_of(c * ff_chunk, 128)
        h = jnp.dot(normed, w1_ref[:, pl.ds(lo, ff_chunk)],
                    preferred_element_type=jnp.float32)
        h = jnp.maximum(h + b1_ref[:, pl.ds(lo, ff_chunk)], 0.0).astype(compute_dtype)
        return acc + jnp.dot(h, w2_ref[pl.ds(lo, ff_chunk), :],
                             preferred_element_type=jnp.float32)

    acc = lax.fori_loop(0, n_chunks, body, jnp.zeros(x.shape, jnp.float32),
                        unroll=True)
    o_ref[...] = (x + acc + b2_ref[...]).astype(o_ref.dtype)


# --------------------------------------------------------------------------
# pallas_call wrappers
# --------------------------------------------------------------------------
def _pallas_ln_proj(x_p, g_p, b_p, w_p, bias_p, *, n_valid, eps, tm, compute_dtype):
    m_pad, dp = x_p.shape
    dout = w_p.shape[1]
    kern = functools.partial(_ln_proj_kernel, n_valid=n_valid, eps=eps,
                             compute_dtype=compute_dtype)
    return pl.pallas_call(
        kern,
        out_shape=jax.ShapeDtypeStruct((m_pad, dout), compute_dtype),
        grid_spec=pltpu.PrefetchScalarGridSpec(
            num_scalar_prefetch=0, grid=(m_pad // tm,),
            in_specs=[pl.BlockSpec((tm, dp), lambda i: (i, 0)),
                      pl.BlockSpec((1, dp), lambda i: (0, 0)),
                      pl.BlockSpec((1, dp), lambda i: (0, 0)),
                      pl.BlockSpec((dp, dout), lambda i: (0, 0)),
                      pl.BlockSpec((1, dout), lambda i: (0, 0))],
            out_specs=pl.BlockSpec((tm, dout), lambda i: (i, 0))),
        compiler_params=pltpu.CompilerParams(dimension_semantics=("parallel",)),
    )(x_p, g_p, b_p, w_p, bias_p)


def _pallas_proj(x_p, w_p, bias_p, *, tm, compute_dtype):
    m_pad, dp = x_p.shape
    dout = w_p.shape[1]
    kern = functools.partial(_proj_kernel, compute_dtype=compute_dtype)
    return pl.pallas_call(
        kern,
        out_shape=jax.ShapeDtypeStruct((m_pad, dout), compute_dtype),
        grid_spec=pltpu.PrefetchScalarGridSpec(
            num_scalar_prefetch=0, grid=(m_pad // tm,),
            in_specs=[pl.BlockSpec((tm, dp), lambda i: (i, 0)),
                      pl.BlockSpec((dp, dout), lambda i: (0, 0)),
                      pl.BlockSpec((1, dout), lambda i: (0, 0))],
            out_specs=pl.BlockSpec((tm, dout), lambda i: (i, 0))),
        compiler_params=pltpu.CompilerParams(dimension_semantics=("parallel",)),
    )(x_p, w_p, bias_p)


def _pallas_attention(kernel_fn, q_like, kv_like, mask, wo, bo, res_b, *,
                      n_heads, dk, dp, compute_dtype):
    nb, tp, qw = q_like.shape
    mrows, kp = mask.shape[1], mask.shape[2]
    in_specs = [pl.BlockSpec((None, tp, qw), lambda b: (b, 0, 0))]
    args = [q_like]
    if kv_like is not None:
        sp, kvw = kv_like.shape[1], kv_like.shape[2]
        in_specs.append(pl.BlockSpec((None, sp, kvw), lambda b: (b, 0, 0)))
        args.append(kv_like)
    in_specs += [pl.BlockSpec((None, mrows, kp), lambda b: (b, 0, 0)),
                 pl.BlockSpec((dp, dp), lambda b: (0, 0)),
                 pl.BlockSpec((1, dp), lambda b: (0, 0)),
                 pl.BlockSpec((None, tp, dp), lambda b: (b, 0, 0))]
    args += [mask, wo, bo, res_b]
    kern = functools.partial(kernel_fn, n_heads=n_heads, dk=dk, dp=dp,
                             scale=1.0 / math.sqrt(dk), compute_dtype=compute_dtype)
    return pl.pallas_call(
        kern,
        out_shape=jax.ShapeDtypeStruct((nb, tp, dp), jnp.float32),
        grid_spec=pltpu.PrefetchScalarGridSpec(
            num_scalar_prefetch=0, grid=(nb,),
            in_specs=in_specs,
            out_specs=pl.BlockSpec((None, tp, dp), lambda b: (b, 0, 0))),
        compiler_params=pltpu.CompilerParams(dimension_semantics=("parallel",)),
    )(*args)


def _pallas_ffn(x_p, g_p, bln_p, w1_p, b1_p, w2_p, b2_p, *, n_valid, eps, tm,
                compute_dtype):
    m_pad, dp = x_p.shape
    fp = w1_p.shape[1]
    ff_chunk = 512 if fp % 512 == 0 else (256 if fp % 256 == 0 else 128)
    kern = functools.partial(_ffn_kernel, n_valid=n_valid, eps=eps,
                             ff_chunk=ff_chunk, compute_dtype=compute_dtype)
    itemsize = jnp.dtype(compute_dtype).itemsize
    need = (2 * 2 * tm * dp * 4                     # double-buffered x / out tiles
            + 2 * (dp * fp + fp * dp) * itemsize    # W1/W2 (constant index map)
            + 4 * (2 * dp + fp) * 4                 # gamma/beta/biases
            + tm * ff_chunk * 4 + tm * dp * 4)      # live chunk + accumulator
    try:
        vmem_cap = pltpu.get_tpu_info().vmem_capacity_bytes
    except Exception:
        vmem_cap = 64 * 2 ** 20                     # safe for all generations
    vmem_limit = int(min(int(0.75 * vmem_cap), max(32 * 2 ** 20, 2 * need)))
    flops = 2 * m_pad * (dp * fp + fp * dp)
    bytes_accessed = int(2 * m_pad * dp * 4 + (dp * fp + fp * dp) * itemsize
                         + (2 * dp + fp + dp + dp) * 4)
    # TODO(synk): for very large d_ff (v7x 64 MiB VMEM), stream W1/W2 via a grid
    #             reduction axis instead of keeping them resident.
    return pl.pallas_call(
        kern,
        out_shape=jax.ShapeDtypeStruct((m_pad, dp), jnp.float32),
        grid_spec=pltpu.PrefetchScalarGridSpec(
            num_scalar_prefetch=0, grid=(m_pad // tm,),
            in_specs=[pl.BlockSpec((tm, dp), lambda i: (i, 0)),
                      pl.BlockSpec((1, dp), lambda i: (0, 0)),
                      pl.BlockSpec((1, dp), lambda i: (0, 0)),
                      pl.BlockSpec((dp, fp), lambda i: (0, 0)),
                      pl.BlockSpec((1, fp), lambda i: (0, 0)),
                      pl.BlockSpec((fp, dp), lambda i: (0, 0)),
                      pl.BlockSpec((1, dp), lambda i: (0, 0))],
            out_specs=pl.BlockSpec((tm, dp), lambda i: (i, 0))),
        compiler_params=pltpu.CompilerParams(
            dimension_semantics=("parallel",), vmem_limit_bytes=vmem_limit),
        cost_estimate=pl.CostEstimate(flops=int(flops), transcendentals=0,
                                      bytes_accessed=bytes_accessed),
    )(x_p, g_p, bln_p, w1_p, b1_p, w2_p, b2_p)


# --------------------------------------------------------------------------
# DecoderLayer forward (eval mode)
# --------------------------------------------------------------------------
def decoder_layer_forward(x, memory, src_mask, tgt_mask, params, *, n_heads,
                          eps=1e-6, compute_dtype=jnp.bfloat16, tm_max=512):
    """x: (B, T, D), memory: (B, S, D). Masks broadcastable to (B, T, T)/(B, T, S),
    nonzero = keep. Weights use (in, out) layout (transposed vs. torch.nn.Linear)."""
    B, T, D = x.shape
    S = memory.shape[1]
    H = n_heads
    assert D % H == 0
    dk = D // H
    Dp = _round_up(D, 128)               # lane-dense feature dim
    Tp = _round_up(T, 8)
    Sp = _round_up(S, 8)
    cdt = compute_dtype

    M, Ms = B * Tp, B * Sp
    tm, m_pad = _token_tiles(M, tm_max)
    tms, ms_pad = _token_tiles(Ms, tm_max)

    def pad_rows(r2, rows):
        return jnp.pad(r2, ((0, rows - r2.shape[0]), (0, 0)))

    def vec(name):
        p = params[name]
        return jnp.pad(p, (0, Dp - p.shape[0])).reshape(1, Dp).astype(jnp.float32)

    # activations: pad seq/feature once; residual carriers stay f32.
    x_b = jnp.pad(x.astype(jnp.float32), ((0, 0), (0, Tp - T), (0, Dp - D)))
    mem_rows = jnp.pad(memory.astype(jnp.float32),
                       ((0, 0), (0, Sp - S), (0, Dp - D))).reshape(Ms, Dp)

    # fused projection weights (pad each block to Dp BEFORE concatenating).
    w_qkv_self = jnp.concatenate([_pad2(params["self_wq"], Dp, Dp),
                                  _pad2(params["self_wk"], Dp, Dp),
                                  _pad2(params["self_wv"], Dp, Dp)], axis=1).astype(cdt)
    b_qkv_self = jnp.concatenate([vec("self_bq"), vec("self_bk"), vec("self_bv")], axis=1)
    w_q_src = _pad2(params["src_wq"], Dp, Dp).astype(cdt)
    b_q_src = vec("src_bq")
    w_kv_src = jnp.concatenate([_pad2(params["src_wk"], Dp, Dp),
                                _pad2(params["src_wv"], Dp, Dp)], axis=1).astype(cdt)
    b_kv_src = jnp.concatenate([vec("src_bk"), vec("src_bv")], axis=1)
    wo_self = _pad2(params["self_wo"], Dp, Dp).astype(jnp.float32)  # sliced per-head in-kernel
    wo_src = _pad2(params["src_wo"], Dp, Dp).astype(jnp.float32)
    bo_self, bo_src = vec("self_bo"), vec("src_bo")

    tgt_m = _prep_mask(tgt_mask, B, Tp, T, Tp)
    src_m = _prep_mask(src_mask, B, Tp, S, Sp)

    # ---- sublayer 0: x + self_attn(LN(x), LN(x), LN(x), tgt_mask) ----
    x_rows = pad_rows(x_b.reshape(M, Dp), m_pad)
    qkv_rows = _pallas_ln_proj(x_rows, vec("ln0_g"), vec("ln0_b"),
                               w_qkv_self, b_qkv_self, n_valid=D, eps=eps,
                               tm=tm, compute_dtype=cdt)
    qkv_b = qkv_rows[:M].reshape(B, Tp, 3 * Dp)
    x1_b = _pallas_attention(_self_attn_kernel, qkv_b, None, tgt_m,
                             wo_self, bo_self, x_b,
                             n_heads=H, dk=dk, dp=Dp, compute_dtype=cdt)

    # ---- sublayer 1: x + src_attn(LN(x), memory, memory, src_mask) ----
    x1_rows = pad_rows(x1_b.reshape(M, Dp), m_pad)
    q_rows = _pallas_ln_proj(x1_rows, vec("ln1_g"), vec("ln1_b"),
                             w_q_src, b_q_src, n_valid=D, eps=eps,
                             tm=tm, compute_dtype=cdt)
    kv_rows = _pallas_proj(pad_rows(mem_rows, ms_pad), w_kv_src, b_kv_src,
                           tm=tms, compute_dtype=cdt)
    q_b = q_rows[:M].reshape(B, Tp, Dp)
    kv_b = kv_rows[:Ms].reshape(B, Sp, 2 * Dp)
    x2_b = _pallas_attention(_cross_attn_kernel, q_b, kv_b, src_m,
                             wo_src, bo_src, x1_b,
                             n_heads=H, dk=dk, dp=Dp, compute_dtype=cdt)

    # ---- sublayer 2: x + FFN(LN(x)) ----
    F = params["ffn_w1"].shape[1]
    Fp = _round_up(F, 128)
    w1_p = _pad2(params["ffn_w1"], Dp, Fp).astype(cdt)
    b1_p = jnp.pad(params["ffn_b1"], (0, Fp - F)).reshape(1, Fp).astype(jnp.float32)
    w2_p = _pad2(params["ffn_w2"], Fp, Dp).astype(cdt)
    b2_p = vec("ffn_b2")
    x2_rows = pad_rows(x2_b.reshape(M, Dp), m_pad)
    x3_rows = _pallas_ffn(x2_rows, vec("ln2_g"), vec("ln2_b"),
                          w1_p, b1_p, w2_p, b2_p, n_valid=D, eps=eps, tm=tm,
                          compute_dtype=cdt)

    return x3_rows[:M].reshape(B, Tp, Dp)[:, :T, :D]


# --------------------------------------------------------------------------
# plain-JAX reference (mirrors the kernel dtypes: bf16 matmul inputs, f32 acc)
# --------------------------------------------------------------------------
def _layer_norm_ref(x, g, b, eps):
    mean = jnp.mean(x, axis=-1, keepdims=True)
    var = jnp.sum((x - mean) ** 2, axis=-1, keepdims=True) / (x.shape[-1] - 1)
    return g * (x - mean) / (jnp.sqrt(var) + eps) + b


def _linear_ref(x, w, b, cdt):
    return jnp.dot(x.astype(cdt), w.astype(cdt),
                   preferred_element_type=jnp.float32) + b


def _attention_ref(q, k, v, mask, cdt):
    dk = q.shape[-1]
    s = jnp.einsum("bhqd,bhkd->bhqk", q.astype(cdt), k.astype(cdt),
                   preferred_element_type=jnp.float32) * (1.0 / math.sqrt(dk))
    s = jnp.where(mask[:, None, :, :] == 0, -1e9, s)
    s = s - jnp.max(s, axis=-1, keepdims=True)
    p = jnp.exp(s)
    p = p / jnp.sum(p, axis=-1, keepdims=True)
    return jnp.einsum("bhqk,bhkd->bhqd", p.astype(cdt), v.astype(cdt),
                      preferred_element_type=jnp.float32)


def _mha_ref(xq, xkv, params, prefix, mask, h, cdt):
    B, Tq, D = xq.shape
    S = xkv.shape[1]
    dk = D // h
    q = _linear_ref(xq, params[prefix + "wq"], params[prefix + "bq"], cdt)
    k = _linear_ref(xkv, params[prefix + "wk"], params[prefix + "bk"], cdt)
    v = _linear_ref(xkv, params[prefix + "wv"], params[prefix + "bv"], cdt)
    q = q.reshape(B, Tq, h, dk).transpose(0, 2, 1, 3)
    k = k.reshape(B, S, h, dk).transpose(0, 2, 1, 3)
    v = v.reshape(B, S, h, dk).transpose(0, 2, 1, 3)
    ctx = _attention_ref(q, k, v, mask, cdt).transpose(0, 2, 1, 3).reshape(B, Tq, D)
    return _linear_ref(ctx, params[prefix + "wo"], params[prefix + "bo"], cdt)


def decoder_layer_ref(x, memory, src_mask, tgt_mask, params, h, eps, cdt):
    B, T, D = x.shape
    S = memory.shape[1]
    tgt_m = jnp.broadcast_to(tgt_mask, (B, T, T))
    src_m = jnp.broadcast_to(src_mask, (B, T, S))
    n0 = _layer_norm_ref(x, params["ln0_g"], params["ln0_b"], eps)
    x1 = x + _mha_ref(n0, n0, params, "self_", tgt_m, h, cdt)
    n1 = _layer_norm_ref(x1, params["ln1_g"], params["ln1_b"], eps)
    x2 = x1 + _mha_ref(n1, memory, params, "src_", src_m, h, cdt)
    n2 = _layer_norm_ref(x2, params["ln2_g"], params["ln2_b"], eps)
    hdn = jnp.maximum(_linear_ref(n2, params["ffn_w1"], params["ffn_b1"], cdt), 0.0)
    f = _linear_ref(hdn, params["ffn_w2"], params["ffn_b2"], cdt)
    return x2 + f


# --------------------------------------------------------------------------
# main
# --------------------------------------------------------------------------
if __name__ == "__main__":
    B, T, S, D, H, F = 2, 8, 8, 32, 4, 64
    eps = 1e-6
    cdt = jnp.bfloat16

    key = jax.random.PRNGKey(0)
    keys = jax.random.split(key, 32)
    ki = iter(keys)

    x = jax.random.normal(next(ki), (B, T, D), jnp.float32)
    memory = jax.random.normal(next(ki), (B, S, D), jnp.float32)

    tgt_mask = jnp.broadcast_to(jnp.tril(jnp.ones((T, T), jnp.int32)), (B, T, T))
    src_mask = jnp.ones((B, 1, S), jnp.int32).at[1, 0, S - 1].set(0)

    def lin_init(k, din, dout):
        bound = 1.0 / math.sqrt(din)
        kw, kb = jax.random.split(k)
        w = jax.random.uniform(kw, (din, dout), jnp.float32, -bound, bound)
        b = jax.random.uniform(kb, (dout,), jnp.float32, -bound, bound)
        return w, b

    params = {}
    for prefix in ("self_", "src_"):
        for nm in ("wq", "wk", "wv", "wo"):
            w, b = lin_init(next(ki), D, D)
            params[prefix + nm] = w
            params[prefix + "b" + nm[1]] = b
    params["ffn_w1"], params["ffn_b1"] = lin_init(next(ki), D, F)
    params["ffn_w2"], params["ffn_b2"] = lin_init(next(ki), F, D)
    for i in range(3):
        params[f"ln{i}_g"] = 1.0 + 0.1 * jax.random.normal(next(ki), (D,), jnp.float32)
        params[f"ln{i}_b"] = 0.1 * jax.random.normal(next(ki), (D,), jnp.float32)

    out = decoder_layer_forward(x, memory, src_mask, tgt_mask, params,
                                n_heads=H, eps=eps, compute_dtype=cdt)
    out = jax.block_until_ready(out)

    ref = decoder_layer_ref(x, memory, src_mask, tgt_mask, params, H, eps, cdt)
    assert out.shape == (B, T, D)
    max_err = float(jnp.max(jnp.abs(out - ref)))
    assert jnp.allclose(out, ref, atol=1e-2, rtol=1e-2), f"max abs err {max_err}"

    print("KERNEL_OK")
</pallas_src>

<mosaic_0001>
module attributes {stable_mosaic.version = 11 : i64} {
  func.func @_ln_proj_kernel(%arg0: i32, %arg1: memref<8x128xf32, #tpu.memory_space<vmem>>, %arg2: memref<1x128xf32, #tpu.memory_space<vmem>>, %arg3: memref<1x128xf32, #tpu.memory_space<vmem>>, %arg4: memref<128x384xbf16, #tpu.memory_space<vmem>>, %arg5: memref<1x384xf32, #tpu.memory_space<vmem>>, %arg6: memref<8x384xbf16, #tpu.memory_space<vmem>>) attributes {dimension_semantics = [#tpu.dimension_semantics<parallel>], iteration_bounds = array<i64: 2>, scalar_prefetch = 0 : i64, scratch_operands = 0 : i64, tpu.core_type = #tpu.core_type<tc>, window_params = [{transform_indices = @transform_0, window_bounds = array<i64: 8, 128>}, {pipeline_mode = #tpu.pipeline_mode<synchronous>, transform_indices = @transform_1, window_bounds = array<i64: 1, 128>}, {pipeline_mode = #tpu.pipeline_mode<synchronous>, transform_indices = @transform_2, window_bounds = array<i64: 1, 128>}, {pipeline_mode = #tpu.pipeline_mode<synchronous>, transform_indices = @transform_3, window_bounds = array<i64: 128, 384>}, {pipeline_mode = #tpu.pipeline_mode<synchronous>, transform_indices = @transform_4, window_bounds = array<i64: 1, 384>}, {transform_indices = @transform_5, window_bounds = array<i64: 8, 384>}]} {
    %c0 = arith.constant 0 : index
    %c0_0 = arith.constant 0 : index
    %0 = vector.load %arg1[%c0, %c0_0] : memref<8x128xf32, #tpu.memory_space<vmem>>, vector<8x128xf32>
    %c0_1 = arith.constant 0 : index
    %c0_2 = arith.constant 0 : index
    %1 = vector.load %arg2[%c0_1, %c0_2] : memref<1x128xf32, #tpu.memory_space<vmem>>, vector<1x128xf32>
    %c0_3 = arith.constant 0 : index
    %c0_4 = arith.constant 0 : index
    %2 = vector.load %arg3[%c0_3, %c0_4] : memref<1x128xf32, #tpu.memory_space<vmem>>, vector<1x128xf32>
    %3 = tpu.iota {dimensions = array<i32: 1>} : vector<8x128xi32>
    %c32_i32 = arith.constant 32 : i32
    %4 = vector.broadcast %c32_i32 : i32 to vector<8x128xi32>
    %5 = arith.cmpi slt, %3, %4 : vector<8x128xi32>
    %cst = arith.constant dense<0.000000e+00> : vector<8xf32>
    %6 = vector.multi_reduction <add>, %0, %cst [1] : vector<8x128xf32> to vector<8xf32>
    %7 = vector.shape_cast %6 : vector<8xf32> to vector<8x1xf32>
    %cst_5 = arith.constant 3.125000e-02 : f32
    %8 = vector.broadcast %cst_5 : f32 to vector<8x1xf32>
    %9 = arith.mulf %7, %8 : vector<8x1xf32>
    %10 = vector.broadcast %9 : vector<8x1xf32> to vector<8x128xf32>
    %11 = arith.subf %0, %10 : vector<8x128xf32>
    %cst_6 = arith.constant 0.000000e+00 : f32
    %12 = vector.broadcast %cst_6 : f32 to vector<8x128xf32>
    %13 = arith.select %5, %11, %12 : vector<8x128xi1>, vector<8x128xf32>
    %14 = arith.mulf %13, %13 : vector<8x128xf32>
    %cst_7 = arith.constant dense<0.000000e+00> : vector<8xf32>
    %15 = vector.multi_reduction <add>, %14, %cst_7 [1] : vector<8x128xf32> to vector<8xf32>
    %16 = vector.shape_cast %15 : vector<8xf32> to vector<8x1xf32>
    %cst_8 = arith.constant 0.0322580636 : f32
    %17 = vector.broadcast %cst_8 : f32 to vector<8x1xf32>
    %18 = arith.mulf %16, %17 : vector<8x1xf32>
    %19 = vector.broadcast %1 : vector<1x128xf32> to vector<8x128xf32>
    %20 = arith.mulf %19, %13 : vector<8x128xf32>
    %21 = math.sqrt %18 : vector<8x1xf32>
    %cst_9 = arith.constant 9.99999997E-7 : f32
    %22 = vector.broadcast %cst_9 : f32 to vector<8x1xf32>
    %23 = arith.addf %21, %22 : vector<8x1xf32>
    %24 = vector.broadcast %23 : vector<8x1xf32> to vector<8x128xf32>
    %25 = arith.divf %20, %24 : vector<8x128xf32>
    %26 = vector.broadcast %2 : vector<1x128xf32> to vector<8x128xf32>
    %27 = arith.addf %25, %26 : vector<8x128xf32>
    %28 = arith.truncf %27 : vector<8x128xf32> to vector<8x128xbf16>
    %c0_10 = arith.constant 0 : index
    %c0_11 = arith.constant 0 : index
    %29 = vector.load %arg4[%c0_10, %c0_11] : memref<128x384xbf16, #tpu.memory_space<vmem>>, vector<128x384xbf16>
    %cst_12 = arith.constant dense<0.000000e+00> : vector<8x384xf32>
    %30 = tpu.matmul %28, %29, %cst_12 {dimension_numbers = #tpu.dot_dimension_numbers<[1], [0], [0], [1], [0, 0, 1, 1], [], []>} : vector<8x128xbf16>, vector<128x384xbf16>, vector<8x384xf32> -> vector<8x384xf32>
    %c0_13 = arith.constant 0 : index
    %c0_14 = arith.constant 0 : index
    %31 = vector.load %arg5[%c0_13, %c0_14] : memref<1x384xf32, #tpu.memory_space<vmem>>, vector<1x384xf32>
    %32 = vector.broadcast %31 : vector<1x384xf32> to vector<8x384xf32>
    %33 = arith.addf %30, %32 : vector<8x384xf32>
    %34 = arith.truncf %33 : vector<8x384xf32> to vector<8x384xbf16>
    %c0_15 = arith.constant 0 : index
    %c0_16 = arith.constant 0 : index
    %35 = vector.load %arg6[%c0_15, %c0_16] : memref<8x384xbf16, #tpu.memory_space<vmem>>, vector<8x384xbf16>
    tpu.vector_store %arg6[%c0_15, %c0_16], %34 {strides = array<i32>} : memref<8x384xbf16, #tpu.memory_space<vmem>>, vector<8x384xbf16>,
    return
  }
  func.func @transform_0(%arg0: i32) -> (i32, i32) {
    %c0_i32 = arith.constant 0 : i32
    %c0_i32_0 = arith.constant 0 : i32
    return %arg0, %c0_i32 : i32, i32
  }
  func.func @transform_1(%arg0: i32) -> (i32, i32) {
    %c0_i32 = arith.constant 0 : i32
    %c0_i32_0 = arith.constant 0 : i32
    %c0_i32_1 = arith.constant 0 : i32
    return %c0_i32, %c0_i32_0 : i32, i32
  }
  func.func @transform_2(%arg0: i32) -> (i32, i32) {
    %c0_i32 = arith.constant 0 : i32
    %c0_i32_0 = arith.constant 0 : i32
    %c0_i32_1 = arith.constant 0 : i32
    return %c0_i32, %c0_i32_0 : i32, i32
  }
  func.func @transform_3(%arg0: i32) -> (i32, i32) {
    %c0_i32 = arith.constant 0 : i32
    %c0_i32_0 = arith.constant 0 : i32
    %c0_i32_1 = arith.constant 0 : i32
    return %c0_i32, %c0_i32_0 : i32, i32
  }
  func.func @transform_4(%arg0: i32) -> (i32, i32) {
    %c0_i32 = arith.constant 0 : i32
    %c0_i32_0 = arith.constant 0 : i32
    %c0_i32_1 = arith.constant 0 : i32
    return %c0_i32, %c0_i32_0 : i32, i32
  }
  func.func @transform_5(%arg0: i32) -> (i32, i32) {
    %c0_i32 = arith.constant 0 : i32
    %c0_i32_0 = arith.constant 0 : i32
    return %arg0, %c0_i32 : i32, i32
  }
}

</mosaic_0001>

<llo_original>
// kernel: tpu_custom_call.1
$region0: #{tpu_custom_call.1}
  #allocation0 [shape = 'u32[]', space=smem, size = 0x4, offset = 0x4, fixed_abs, tag = 'smem constant byte address 0x4 - core index']
  #allocation1 [shape = 'u32[72,128]{1,0:T(1,128)}', space=vmem, size = 0x9000, scoped, tag = 'internal scratch']
  %s0 = inlined_call_operand.hbm [shape: f32[16,128], index: 0, kind: input, shape index: {}]
  %s1 = inlined_call_operand.hbm [shape: f32[1,128], index: 1, kind: input, shape index: {}]
  %s2 = inlined_call_operand.hbm [shape: f32[1,128], index: 2, kind: input, shape index: {}]
  %s3 = inlined_call_operand.hbm [shape: bf16[128,384], index: 3, kind: input, shape index: {}]
  %s4 = inlined_call_operand.vmem [shape: f32[1,384], index: 4, kind: input, shape index: {}]
  %s5 = inlined_call_operand.hbm [shape: bf16[16,384], index: 5, kind: output, shape index: {}]
  %s6 = sld [smem:[#allocation0]]
  $region69: #{tpu_custom_call.1} parent=0
    _
  %s8 = ssub.s32 1, %s6
  %s9 = scalar_select 0, %s8, %s6
  $region1: #{tpu_custom_call.1} parent=0
    #allocation2 [shape = 'u8[8192]{0}', space=vmem, size = 0x2000, scoped, tag = 'input window, operand 0']
    #allocation3 [shape = 's32[2]{0}', space=sflag, size = 0x8, scoped, tag = 'scoped memory for tpu_custom_call.1']
    #allocation4 [shape = 's32[2]{0}', space=sflag, size = 0x8, scoped, tag = 'scoped memory for tpu_custom_call.1']
    #allocation5 [shape = 'u8[512]{0}', space=vmem, size = 0x400, scoped, tag = 'input window, operand 1, single buffered']
    #allocation6 [shape = 's32[1]{0}', space=sflag, size = 0x4, scoped, tag = 'scoped memory for tpu_custom_call.1']
    #allocation7 [shape = 'u8[512]{0}', space=vmem, size = 0x400, scoped, tag = 'input window, operand 2, single buffered']
    #allocation8 [shape = 'u8[98304]{0}', space=vmem, size = 0x18000, scoped, tag = 'input window, operand 3, single buffered']
    #allocation9 [shape = 's32[1]{0}', space=sflag, size = 0x4, scoped, tag = 'scoped memory for tpu_custom_call.1']
    #allocation10 [shape = 'u8[12288]{0}', space=vmem, size = 0x3000, scoped, tag = 'output window, operand 0']
    %10 = vsyncpa [#allocation3], 0
    %s11 = scalar_lea.sflag [#allocation3], 1
    %12 = vsyncpa %s11, 0
    %13 = vsyncpa [#allocation6], 0
    %14 = vsyncpa [#allocation9], 0
    %15 = vsyncpa [#allocation4], 0
    %s16 = scalar_lea.sflag [#allocation4], 1
    %17 = vsyncpa %s16, 0
    loop: start=0, step=1, limit=4
    $region2: #{tpu_custom_call.1} parent=1 // loop_pre_header
      _
    $region3: #{tpu_custom_call.1} parent=1 // loop_header
      %s19 = sphi 0, %s23
      %p20 = scmp.ge.s32.totalorder %s19, 4
      %s29 = sphi 0, %s31
      %s32 = sphi 0, %s29
      %s33 = sphi 0, %s32
      %s49 = sphi 0, %s33
      %s53 = sphi 0, %s53
      %s55 = sphi 0, %s53
      %s56 = sphi 0, %s55
      %s70 = sphi 0, %s56
      %s74 = sphi 0, %s74
      %s76 = sphi 0, %s74
      %s77 = sphi 0, %s76
      %s91 = sphi 0, %s77
      %s95 = sphi 0, %s95
      %s97 = sphi 0, %s95
      %s98 = sphi 0, %s97
      %s112 = sphi 0, %s98
      %s116 = sphi 0, %s116
      %s118 = sphi 0, %s116
      %s119 = sphi 0, %s118
      %s133 = sphi 0, %s119
      %s139 = sphi 0, %s141
      %s142 = sphi 0, %s139
      %s143 = sphi 0, %s142
      %s159 = sphi 0, %s143
    $region4: #{tpu_custom_call.1} parent=1 // loop_header_branch
      %22 = sbr.rel (%p20) target = $region8
    $region5: #{tpu_custom_call.1} parent=1 // loop_body
      %s24 = ssub.s32 %s19, 1
      %s25 = ssub.s32 %s19, 2
      %s26 = sadd.s32 %s19, 1
      %s27 = ssub.s32 %s19, %s26
      %p28 = scmp.eq.s32.totalorder %s27, 0
      %s30 = sadd.s32 %s29, 1
      %s31 = scalar_select %p28, %s29, %s30
      %p34 = pneg %p28
      %p35 = scmp.eq.s32.totalorder %s19, 1
      %p36 = por %p34, %p35
      %p37 = scmp.ne.s32.totalorder %s29, %s32
      %p38 = scmp.eq.s32.totalorder %s19, 0
      %p39 = por %p37, %p38
      %p40 = scmp.ne.s32.totalorder %s29, %s32
      %p41 = scmp.eq.s32.totalorder %s24, 1
      %p42 = por %p40, %p41
      %p43 = scmp.ne.s32.totalorder %s32, %s33
      %p44 = scmp.eq.s32.totalorder %s24, 0
      %p45 = por %p43, %p44
      %p46 = scmp.ne.s32.totalorder %s32, %s33
      %p47 = scmp.eq.s32.totalorder %s25, 1
      %p48 = por %p46, %p47
      %p50 = scmp.ne.s32.totalorder %s33, %s49
      %p51 = scmp.eq.s32.totalorder %s25, 0
      %p52 = por %p50, %p51
      %s54 = sadd.s32 %s53, 1
      %p57 = scmp.eq.s32.totalorder %s19, 1
      %p58 = scmp.ne.s32.totalorder %s53, %s55
      %p59 = scmp.eq.s32.totalorder %s19, 0
      %p60 = por %p58, %p59
      %p61 = scmp.ne.s32.totalorder %s53, %s55
      %p62 = scmp.eq.s32.totalorder %s24, 1
      %p63 = por %p61, %p62
      %p64 = scmp.ne.s32.totalorder %s55, %s56
      %p65 = scmp.eq.s32.totalorder %s24, 0
      %p66 = por %p64, %p65
      %p67 = scmp.ne.s32.totalorder %s55, %s56
      %p68 = scmp.eq.s32.totalorder %s25, 1
      %p69 = por %p67, %p68
      %p71 = scmp.ne.s32.totalorder %s56, %s70
      %p72 = scmp.eq.s32.totalorder %s25, 0
      %p73 = por %p71, %p72
      %s75 = sadd.s32 %s74, 1
      %p78 = scmp.eq.s32.totalorder %s19, 1
      %p79 = scmp.ne.s32.totalorder %s74, %s76
      %p80 = scmp.eq.s32.totalorder %s19, 0
      %p81 = por %p79, %p80
      %p82 = scmp.ne.s32.totalorder %s74, %s76
      %p83 = scmp.eq.s32.totalorder %s24, 1
      %p84 = por %p82, %p83
      %p85 = scmp.ne.s32.totalorder %s76, %s77
      %p86 = scmp.eq.s32.totalorder %s24, 0
      %p87 = por %p85, %p86
      %p88 = scmp.ne.s32.totalorder %s76, %s77
      %p89 = scmp.eq.s32.totalorder %s25, 1
      %p90 = por %p88, %p89
      %p92 = scmp.ne.s32.totalorder %s77, %s91
      %p93 = scmp.eq.s32.totalorder %s25, 0
      %p94 = por %p92, %p93
      %s96 = sadd.s32 %s95, 1
      %p99 = scmp.eq.s32.totalorder %s19, 1
      %p100 = scmp.ne.s32.totalorder %s95, %s97
      %p101 = scmp.eq.s32.totalorder %s19, 0
      %p102 = por %p100, %p101
      %p103 = scmp.ne.s32.totalorder %s95, %s97
      %p104 = scmp.eq.s32.totalorder %s24, 1
      %p105 = por %p103, %p104
      %p106 = scmp.ne.s32.totalorder %s97, %s98
      %p107 = scmp.eq.s32.totalorder %s24, 0
      %p108 = por %p106, %p107
      %p109 = scmp.ne.s32.totalorder %s97, %s98
      %p110 = scmp.eq.s32.totalorder %s25, 1
      %p111 = por %p109, %p110
      %p113 = scmp.ne.s32.totalorder %s98, %s112
      %p114 = scmp.eq.s32.totalorder %s25, 0
      %p115 = por %p113, %p114
      %s117 = sadd.s32 %s116, 1
      %p120 = scmp.eq.s32.totalorder %s19, 1
      %p121 = scmp.ne.s32.totalorder %s116, %s118
      %p122 = scmp.eq.s32.totalorder %s19, 0
      %p123 = por %p121, %p122
      %p124 = scmp.ne.s32.totalorder %s116, %s118
      %p125 = scmp.eq.s32.totalorder %s24, 1
      %p126 = por %p124, %p125
      %p127 = scmp.ne.s32.totalorder %s118, %s119
      %p128 = scmp.eq.s32.totalorder %s24, 0
      %p129 = por %p127, %p128
      %p130 = scmp.ne.s32.totalorder %s118, %s119
      %p131 = scmp.eq.s32.totalorder %s25, 1
      %p132 = por %p130, %p131
      %p134 = scmp.ne.s32.totalorder %s119, %s133
      %p135 = scmp.eq.s32.totalorder %s25, 0
      %p136 = por %p134, %p135
      %s137 = ssub.s32 %s19, %s26
      %p138 = scmp.eq.s32.totalorder %s137, 0
      %s140 = sadd.s32 %s139, 1
      %s141 = scalar_select %p138, %s139, %s140
      %p144 = pneg %p138
      %p145 = scmp.eq.s32.totalorder %s19, 1
      %p146 = por %p144, %p145
      %p147 = scmp.ne.s32.totalorder %s139, %s142
      %p148 = scmp.eq.s32.totalorder %s19, 0
      %p149 = por %p147, %p148
      %p150 = scmp.ne.s32.totalorder %s139, %s142
      %p151 = scmp.eq.s32.totalorder %s24, 1
      %p152 = por %p150, %p151
      %p153 = scmp.ne.s32.totalorder %s142, %s143
      %p154 = scmp.eq.s32.totalorder %s24, 0
      %p155 = por %p153, %p154
      %p156 = scmp.ne.s32.totalorder %s142, %s143
      %p157 = scmp.eq.s32.totalorder %s25, 1
      %p158 = por %p156, %p157
      %p160 = scmp.ne.s32.totalorder %s143, %s159
      %p161 = scmp.eq.s32.totalorder %s25, 0
      %p162 = por %p160, %p161
      %p163 = scmp.le.s32.totalorder 1, %s19
      %p164 = scmp.lt.s32.totalorder %s19, 3
      %p165 = pnand %p163, %p164
      %p166 = pneg %p165
      // Predicated region
      $region9: #{tpu_custom_call.1} parent=5 // pred_check
        _
      $region10: #{tpu_custom_call.1} parent=5 // pred_check_branch
        %168 = sbr.rel (%p165) target = $region12
      $region11: #{tpu_custom_call.1} parent=5 // pred_region
        %s169 = ssub.s32 %s19, 1
        // Predicated region
        $region13: #{tpu_custom_call.1} parent=11 // pred_check
          %p170 = pneg %p66
        $region14: #{tpu_custom_call.1} parent=11 // pred_check_branch
          %172 = sbr.rel (%p170) target = $region16
        $region15: #{tpu_custom_call.1} parent=11 // pred_region
          %174 = vsyncadd [#allocation6], 0
          %s176 = sshll.u32 %s1, 4
          %s177 = int_to_ptr.hbm [resolvable:$true] %s176
          %s178 = sshll.u32 [#allocation5], 4
          %s179 = int_to_ptr.vmem [resolvable:$true] %s178
          %181 = dma.hbm_to_vmem [thread:$0]  %s177, 16, %s179, [#allocation6]
        $region16: #{tpu_custom_call.1} parent=11 // pred_fallthru
          _
        // Predicated region
        $region17: #{tpu_custom_call.1} parent=11 // pred_check
          %p182 = pneg %p87
        $region18: #{tpu_custom_call.1} parent=11 // pred_check_branch
          %184 = sbr.rel (%p182) target = $region20
        $region19: #{tpu_custom_call.1} parent=11 // pred_region
          %186 = vsyncadd [#allocation6], 0
          %s188 = sshll.u32 %s2, 4
          %s189 = int_to_ptr.hbm [resolvable:$true] %s188
          %s190 = sshll.u32 [#allocation7], 4
          %s191 = int_to_ptr.vmem [resolvable:$true] %s190
          %193 = dma.hbm_to_vmem [thread:$0]  %s189, 16, %s191, [#allocation6]
        $region20: #{tpu_custom_call.1} parent=11 // pred_fallthru
          _
        // Predicated region
        $region21: #{tpu_custom_call.1} parent=11 // pred_check
          %p194 = pneg %p108
        $region22: #{tpu_custom_call.1} parent=11 // pred_check_branch
          %196 = sbr.rel (%p194) target = $region24
        $region23: #{tpu_custom_call.1} parent=11 // pred_region
          %198 = vsyncadd [#allocation9], 0
          %s199 = sshll.u32 %s3, 4
          %s200 = int_to_ptr.hbm [resolvable:$true] %s199
          %s201 = sshll.u32 [#allocation8], 4
          %s202 = int_to_ptr.vmem [resolvable:$true] %s201
          %207 = dma.hbm_to_vmem [thread:$0]  %s200, 3072, %s202, [#allocation9], 192, 192, 12
        $region24: #{tpu_custom_call.1} parent=11 // pred_fallthru
          _
        // Predicated region
        $region25: #{tpu_custom_call.1} parent=11 // pred_check
          %p208 = pneg %p129
        $region26: #{tpu_custom_call.1} parent=11 // pred_check_branch
          %210 = sbr.rel (%p208) target = $region28
        $region27: #{tpu_custom_call.1} parent=11 // pred_region
          _
        $region28: #{tpu_custom_call.1} parent=11 // pred_fallthru
          _
      $region12: #{tpu_custom_call.1} parent=5 // pred_fallthru
        _
      %p211 = scmp.lt.s32.totalorder %s19, 2
      // Predicated region
      $region29: #{tpu_custom_call.1} parent=5 // pred_check
        %p212 = pneg %p211
      $region30: #{tpu_custom_call.1} parent=5 // pred_check_branch
        %214 = sbr.rel (%p212) target = $region32
      $region31: #{tpu_custom_call.1} parent=5 // pred_region
        // Predicated region
        $region33: #{tpu_custom_call.1} parent=31 // pred_check
          %p215 = pneg %p39
        $region34: #{tpu_custom_call.1} parent=31 // pred_check_branch
          %217 = sbr.rel (%p215) target = $region36
        $region35: #{tpu_custom_call.1} parent=31 // pred_region
          %s218 = sand.u32 %s29, 1
          %s219 = scalar_lea.sflag [#allocation3], %s218
          %s220 = sand.u32 %s29, 1
          %s221 = smul.addr %s220, 8
          %s222 = scalar_lea.vmem [#allocation2], %s221
          %224 = vsyncadd %s219, 0
          %s225 = smul.addr %s19, 8
          %s226 = scalar_lea.hbm %s0, %s225
          %s228 = sshll.u32 %s226, 4
          %s229 = int_to_ptr.hbm [resolvable:$true] %s228
          %s230 = sshll.u32 %s222, 4
          %s231 = int_to_ptr.vmem [resolvable:$true] %s230
          %233 = dma.hbm_to_vmem [thread:$0]  %s229, 128, %s231, %s219
        $region36: #{tpu_custom_call.1} parent=31 // pred_fallthru
          _
      $region32: #{tpu_custom_call.1} parent=5 // pred_fallthru
        _
      %p234 = scmp.le.s32.totalorder 1, %s19
      %p235 = scmp.lt.s32.totalorder %s19, 3
      %p236 = pnand %p234, %p235
      %p237 = pneg %p236
      // Predicated region
      $region37: #{tpu_custom_call.1} parent=5 // pred_check
        _
      $region38: #{tpu_custom_call.1} parent=5 // pred_check_branch
        %239 = sbr.rel (%p236) target = $region40
      $region39: #{tpu_custom_call.1} parent=5 // pred_region
        %s240 = ssub.s32 %s19, 1
        %s241 = sand.u32 %s32, 1
        %s242 = scalar_lea.sflag [#allocation3], %s241
        %s243 = sand.u32 %s32, 1
        %s244 = smul.addr %s243, 8
        %s245 = scalar_lea.vmem [#allocation2], %s244
        // Predicated region
        $region41: #{tpu_custom_call.1} parent=39 // pred_check
          %p246 = pneg %p45
        $region42: #{tpu_custom_call.1} parent=39 // pred_check_branch
          %248 = sbr.rel (%p246) target = $region44
        $region43: #{tpu_custom_call.1} parent=39 // pred_region
          %250 = dma.done %s242, 128
        $region44: #{tpu_custom_call.1} parent=39 // pred_fallthru
          _
        // Predicated region
        $region45: #{tpu_custom_call.1} parent=39 // pred_check
          %p251 = pneg %p66
        $region46: #{tpu_custom_call.1} parent=39 // pred_check_branch
          %253 = sbr.rel (%p251) target = $region48
        $region47: #{tpu_custom_call.1} parent=39 // pred_region
          %255 = dma.done [#allocation6], 16
        $region48: #{tpu_custom_call.1} parent=39 // pred_fallthru
          _
        // Predicated region
        $region49: #{tpu_custom_call.1} parent=39 // pred_check
          %p256 = pneg %p87
        $region50: #{tpu_custom_call.1} parent=39 // pred_check_branch
          %258 = sbr.rel (%p256) target = $region52
        $region51: #{tpu_custom_call.1} parent=39 // pred_region
          %260 = dma.done [#allocation6], 16
        $region52: #{tpu_custom_call.1} parent=39 // pred_fallthru
          _
        // Predicated region
        $region53: #{tpu_custom_call.1} parent=39 // pred_check
          %p261 = pneg %p108
        $region54: #{tpu_custom_call.1} parent=39 // pred_check_branch
          %263 = sbr.rel (%p261) target = $region56
        $region55: #{tpu_custom_call.1} parent=39 // pred_region
          %265 = dma.done [#allocation9], 3072
        $region56: #{tpu_custom_call.1} parent=39 // pred_fallthru
          _
        %s266 = sand.u32 %s32, 1
        %s267 = scalar_lea.sflag [#allocation3], %s266
        %s268 = sand.u32 %s32, 1
        %s269 = smul.addr %s268, 8
        %s270 = scalar_lea.vmem [#allocation2], %s269
        %p271 = pneg %p45
        %p272 = pneg %p42
        %p273 = pneg %p66
        %p274 = pneg %p63
        %p275 = pneg %p87
        %p276 = pneg %p84
        %p277 = pneg %p108
        %p278 = pneg %p105
        %p279 = pneg %p129
        %p280 = pneg %p126
        %p281 = pneg %p155
        %p282 = pneg %p152
        %s283 = sand.u32 %s142, 1
        %s284 = scalar_lea.sflag [#allocation4], %s283
        %s285 = sand.u32 %s142, 1
        %s286 = smul.addr %s285, 12
        %s287 = scalar_lea.vmem [#allocation10], %s286
        %v288 = vld [vmem:[%s245] sm:$0xff]
        %v289 = vld [vmem:[#allocation5] sm:$0x1]
        %v290 = vld [vmem:[#allocation7] sm:$0x1]
        %v291 = vlaneseq
        %v292 = vand.u32 %v291, 127
        %vm293 = vcmp.lt.s32.totalorder %v292, 32
        %294 = vadd.xlane.f32.xlu0 %v288
        %v295 = vpop.xlane.xlu0 %294
        %v296 = vmul.f32 %v295, 0.03125
        %v297 = vsub.f32 %v288, %v296
        %v298 = vsel %vm293, %v297, 0.0
        %v299 = vmul.f32 %v298, %v298
        %300 = vadd.xlane.f32.xlu0 %v299
        %v301 = vpop.xlane.xlu0 %300
        %v302 = vmul.f32 %v301, 0.032258064
        %v304 = vperm.slane %v289, 0
        %v306 = vmul.f32 %v304, %v298
        %v307 = vrsqrt.pop %v302
        %v308 = vmul.f32 %v307, %v302
        %v309 = vmul.f32 %v308, %v307
        %v310 = vmul.f32 0.5, %v309
        %v311 = vsub.f32 1.5, %v310
        %v312 = vmul.f32 %v307, %v311
        %v313 = vmul.f32 %v302, %v312
        %vm314 = vcmp.eq.f32.partialorder %v302, inf
        %v315 = vsel %vm314, %v302, %v313
        %vm316 = vcmp.eq.f32.partialorder %v302, 0.0
        %v317 = vand.u32 %v302, 2147483648
        %v318 = vsel %vm316, %v317, %v315
        %v319 = vadd.f32 %v318, 1e-06
        %v320 = vrcp.pop %v319
        %v321 = vmul.f32 %v319, %v320
        %v322 = vsub.f32 1.0, %v321
        %v323 = vmul.f32 %v320, %v322
        %v324 = vadd.f32 %v320, %v323
        %vm325 = vweird.f32 %v319
        %vm326 = vweird.f32 %v320
        %vm327 = vmor %vm325, %vm326
        %v328 = vsel %vm327, %v320, %v324
        %v329 = vand.u32 2147483647, %v319
        %vm330 = vcmp.eq.f32.partialorder %v329, 8.507059e+37
        %v331 = vand.u32 %v319, 2147483648
        %v332 = vor.u32 1.1754944e-38, %v331
        %v333 = vsel %vm330, %v332, %v328
        %v334 = vmul.f32 %v306, %v333
        %v336 = vperm.slane %v290, 0
        %v338 = vadd.f32 %v334, %v336
        %v339 = vpack.c.bf16 %v338, %v338
        %v340 = vld [vmem:[#allocation8] sm:$0xff]
        %v341 = vld [vmem:[#allocation8 + $0x8] sm:$0xf]
        %v342 = vld [vmem:[#allocation8 + $0xc] sm:$0xff]
        %v343 = vld [vmem:[#allocation8 + $0x14] sm:$0xf]
        %v344 = vld [vmem:[#allocation8 + $0x18] sm:$0xff]
        %v345 = vld [vmem:[#allocation8 + $0x20] sm:$0xf]
        %v346 = vld [vmem:[#allocation8 + $0x24] sm:$0xff]
        %v347 = vld [vmem:[#allocation8 + $0x2c] sm:$0xf]
        %v348 = vld [vmem:[#allocation8 + $0x30] sm:$0xff]
        %v349 = vld [vmem:[#allocation8 + $0x38] sm:$0xf]
        %v350 = vld [vmem:[#allocation8 + $0x3c] sm:$0xff]
        %v351 = vld [vmem:[#allocation8 + $0x44] sm:$0xf]
        %v352 = vld [vmem:[#allocation8 + $0x48] sm:$0xff]
        %v353 = vld [vmem:[#allocation8 + $0x50] sm:$0xf]
        %v354 = vld [vmem:[#allocation8 + $0x54] sm:$0xff]
        %v355 = vld [vmem:[#allocation8 + $0x5c] sm:$0xf]
        %v356 = vld [vmem:[#allocation8 + $0x60] sm:$0xff]
        %v357 = vld [vmem:[#allocation8 + $0x68] sm:$0xf]
        %v358 = vld [vmem:[#allocation8 + $0x6c] sm:$0xff]
        %v359 = vld [vmem:[#allocation8 + $0x74] sm:$0xf]
        %v360 = vld [vmem:[#allocation8 + $0x78] sm:$0xff]
        %v361 = vld [vmem:[#allocation8 + $0x80] sm:$0xf]
        %v362 = vld [vmem:[#allocation8 + $0x84] sm:$0xff]
        %v363 = vld [vmem:[#allocation8 + $0x8c] sm:$0xf]
        %v364 = vld [vmem:[#allocation8 + $0x90] sm:$0xff]
        %v365 = vld [vmem:[#allocation8 + $0x98] sm:$0xf]
        %v366 = vld [vmem:[#allocation8 + $0x9c] sm:$0xff]
        %v367 = vld [vmem:[#allocation8 + $0xa4] sm:$0xf]
        %v368 = vld [vmem:[#allocation8 + $0xa8] sm:$0xff]
        %v369 = vld [vmem:[#allocation8 + $0xb0] sm:$0xf]
        %v370 = vld [vmem:[#allocation8 + $0xb4] sm:$0xff]
        %v371 = vld [vmem:[#allocation8 + $0xbc] sm:$0xf]
        %v372 = vld [vmem:[%s4] sm:$0x7]
        %v374 = vperm.slane %v372, 0
        %v375 = vperm.slane %v372, 1
        %v376 = vperm.slane %v372, 2
        %v412 = vunpack.c.l.b16 %v340
        %v413 = vunpack.c.h.b16 %v340
        %v414 = vunpack.c.l.b16 %v341
        %v415 = vunpack.c.l.b16 %v342
        %v416 = vunpack.c.h.b16 %v342
        %v417 = vunpack.c.l.b16 %v343
        %v418 = vunpack.c.l.b16 %v344
        %v419 = vunpack.c.h.b16 %v344
        %v420 = vunpack.c.l.b16 %v345
        %v421 = vunpack.c.l.b16 %v346
        %v422 = vunpack.c.h.b16 %v346
        %v423 = vunpack.c.l.b16 %v347
        %v424 = vunpack.c.l.b16 %v348
        %v425 = vunpack.c.h.b16 %v348
        %v426 = vunpack.c.l.b16 %v349
        %v427 = vunpack.c.l.b16 %v350
        %v428 = vunpack.c.h.b16 %v350
        %v429 = vunpack.c.l.b16 %v351
        %v430 = vunpack.c.l.b16 %v352
        %v431 = vunpack.c.h.b16 %v352
        %v432 = vunpack.c.l.b16 %v353
        %v433 = vunpack.c.l.b16 %v354
        %v434 = vunpack.c.h.b16 %v354
        %v435 = vunpack.c.l.b16 %v355
        %v436 = vunpack.c.l.b16 %v356
        %v437 = vunpack.c.h.b16 %v356
        %v438 = vunpack.c.l.b16 %v357
        %v439 = vunpack.c.l.b16 %v358
        %v440 = vunpack.c.h.b16 %v358
        %v441 = vunpack.c.l.b16 %v359
        %v442 = vunpack.c.l.b16 %v360
        %v443 = vunpack.c.h.b16 %v360
        %v444 = vunpack.c.l.b16 %v361
        %v445 = vunpack.c.l.b16 %v362
        %v446 = vunpack.c.h.b16 %v362
        %v447 = vunpack.c.l.b16 %v363
        %v448 = vunpack.c.l.b16 %v364
        %v449 = vunpack.c.h.b16 %v364
        %v450 = vunpack.c.l.b16 %v365
        %v451 = vunpack.c.l.b16 %v366
        %v452 = vunpack.c.h.b16 %v366
        %v453 = vunpack.c.l.b16 %v367
        %v454 = vunpack.c.l.b16 %v368
        %v455 = vunpack.c.h.b16 %v368
        %v456 = vunpack.c.l.b16 %v369
        %v457 = vunpack.c.l.b16 %v370
        %v458 = vunpack.c.h.b16 %v370
        %v459 = vunpack.c.l.b16 %v371
        %v460 = vpack.c.b16 %v415, %v412
        %v461 = vpack.c.b16 %v416, %v413
        %v462 = vpack.c.b16 %v417, %v414
        %v463 = vpack.c.b16 %v421, %v418
        %v464 = vpack.c.b16 %v422, %v419
        %v465 = vpack.c.b16 %v423, %v420
        %v466 = vpack.c.b16 %v427, %v424
        %v467 = vpack.c.b16 %v428, %v425
        %v468 = vpack.c.b16 %v429, %v426
        %v469 = vpack.c.b16 %v433, %v430
        %v470 = vpack.c.b16 %v434, %v431
        %v471 = vpack.c.b16 %v435, %v432
        %v472 = vpack.c.b16 %v439, %v436
        %v473 = vpack.c.b16 %v440, %v437
        %v474 = vpack.c.b16 %v441, %v438
        %v475 = vpack.c.b16 %v445, %v442
        %v476 = vpack.c.b16 %v446, %v443
        %v477 = vpack.c.b16 %v447, %v444
        %v478 = vpack.c.b16 %v451, %v448
        %v479 = vpack.c.b16 %v452, %v449
        %v480 = vpack.c.b16 %v453, %v450
        %v481 = vpack.c.b16 %v457, %v454
        %v482 = vpack.c.b16 %v458, %v455
        %v483 = vpack.c.b16 %v459, %v456
        %508 = vmatpush.bf16.msra.mxu0 %v481
        %509 = vmatpush.bf16.msra.mxu0 %v478
        %510 = vmatpush.bf16.msra.mxu0 %v475
        %511 = vmatpush.bf16.msra.mxu0 %v472
        %512 = vmatpush.bf16.msra.mxu0 %v469
        %513 = vmatpush.bf16.msra.mxu0 %v466
        %514 = vmatpush.bf16.msra.mxu0 %v463
        %515 = vmatpush.bf16.msra.mxu0 %v460
        %516 = vmatmul.bf16.gmra.mxu0 %v339
        %v517 = vpop.f32.mrf.mxu0
        %v518 = vadd.f32 %v374, %v517
        %v519 = vpop.f32.mrf.mxu0
        %520 = vdwg.mxu0
        %521 = vmatpush.bf16.msra.mxu0 %v482
        %522 = vmatpush.bf16.msra.mxu0 %v479
        %523 = vmatpush.bf16.msra.mxu0 %v476
        %524 = vmatpush.bf16.msra.mxu0 %v473
        %525 = vmatpush.bf16.msra.mxu0 %v470
        %526 = vmatpush.bf16.msra.mxu0 %v467
        %527 = vmatpush.bf16.msra.mxu0 %v464
        %528 = vmatpush.bf16.msra.mxu0 %v461
        %529 = vmatmul.bf16.gmra.mxu0 %v339
        %v530 = vpop.f32.mrf.mxu0
        %v531 = vadd.f32 %v375, %v530
        %v532 = vpop.f32.mrf.mxu0
        %533 = vdwg.mxu0
        %534 = vmatpush.bf16.msra.mxu0 %v483
        %535 = vmatpush.bf16.msra.mxu0 %v480
        %536 = vmatpush.bf16.msra.mxu0 %v477
        %537 = vmatpush.bf16.msra.mxu0 %v474
        %538 = vmatpush.bf16.msra.mxu0 %v471
        %539 = vmatpush.bf16.msra.mxu0 %v468
        %540 = vmatpush.bf16.msra.mxu0 %v465
        %541 = vmatpush.bf16.msra.mxu0 %v462
        %542 = vmatmul.bf16.gmra.mxu0 %v339
        %v543 = vpop.f32.mrf.mxu0
        %v544 = vadd.f32 %v376, %v543
        %v545 = vpop.f32.mrf.mxu0
        %546 = vdwg.mxu0
        %v547 = vpack.c.bf16 %v531, %v518
        %v548 = vpack.c.bf16 %v544, %v544
        %549 = vst [vmem:[%s287] sm:$0xff] %v547
        %550 = vst [vmem:[%s287 + $0x8] sm:$0xf] %v548
        %s551 = sand.u32 %s142, 1
        %s552 = scalar_lea.sflag [#allocation4], %s551
        %s553 = sand.u32 %s142, 1
        %s554 = smul.addr %s553, 12
        %s555 = scalar_lea.vmem [#allocation10], %s554
        // Predicated region
        $region57: #{tpu_custom_call.1} parent=39 // pred_check
          %p556 = pneg %p152
        $region58: #{tpu_custom_call.1} parent=39 // pred_check_branch
          %558 = sbr.rel (%p556) target = $region60
        $region59: #{tpu_custom_call.1} parent=39 // pred_region
          %560 = vsyncadd %s552, 0
          %s561 = smul.addr %s24, 3
          %s562 = smul.addr %s561, 4
          %s563 = scalar_lea.hbm %s5, %s562
          %s565 = sshll.u32 %s555, 4
          %s566 = int_to_ptr.vmem [resolvable:$true] %s565
          %s567 = sshll.u32 %s563, 4
          %s568 = int_to_ptr.hbm [resolvable:$true] %s567
          %570 = dma.vmem_to_hbm [thread:$0]  %s566, 192, %s568, %s552
        $region60: #{tpu_custom_call.1} parent=39 // pred_fallthru
          _
      $region40: #{tpu_custom_call.1} parent=5 // pred_fallthru
        _
      %p571 = scmp.le.s32.totalorder 2, %s19
      // Predicated region
      $region61: #{tpu_custom_call.1} parent=5 // pred_check
        %p572 = pneg %p571
      $region62: #{tpu_custom_call.1} parent=5 // pred_check_branch
        %574 = sbr.rel (%p572) target = $region64
      $region63: #{tpu_custom_call.1} parent=5 // pred_region
        %s575 = ssub.s32 %s19, 2
        // Predicated region
        $region65: #{tpu_custom_call.1} parent=63 // pred_check
          %p576 = pneg %p158
        $region66: #{tpu_custom_call.1} parent=63 // pred_check_branch
          %578 = sbr.rel (%p576) target = $region68
        $region67: #{tpu_custom_call.1} parent=63 // pred_region
          %s579 = sand.u32 %s143, 1
          %s580 = scalar_lea.sflag [#allocation4], %s579
          %s581 = sand.u32 %s143, 1
          %s582 = smul.addr %s581, 12
          %s583 = scalar_lea.vmem [#allocation10], %s582
          %585 = dma.done %s580, 192
        $region68: #{tpu_custom_call.1} parent=63 // pred_fallthru
          _
      $region64: #{tpu_custom_call.1} parent=5 // pred_fallthru
        _
    $region6: #{tpu_custom_call.1} parent=1 // loop_footer
      %s23 = sadd.s32 1, %s19
    $region7: #{tpu_custom_call.1} parent=1 // loop_footer_branch
      %18 = sbr.rel target = $region3
    $region8: #{tpu_custom_call.1} parent=1 // loop_exit
      _
    %586 = vsyncpa [#allocation3], 1
    %s587 = scalar_lea.sflag [#allocation3], 1
    %588 = vsyncpa %s587, 1
    %589 = vsyncpa [#allocation6], 1
    %590 = vsyncpa [#allocation9], 1
    %591 = vsyncpa [#allocation4], 1
    %s592 = scalar_lea.sflag [#allocation4], 1
    %593 = vsyncpa %s592, 1

</llo_original>
